<compile_context>
chip_gen: v7x
topology: tpu7x:2x2x1
jax: 0.10.0
libtpu: 0.0.40
codegen_flags: <defaults>
</compile_context>

<pallas_src>
import functools

import jax
import jax.numpy as jnp
from jax import lax
from jax.experimental import pallas as pl
from jax.experimental.pallas import tpu as pltpu


def _add_norm_kernel(x_ref, res_ref, gamma_ref, beta_ref, o_ref, *, eps):
    # x_ref / res_ref: (tm, d_model) tiles of tokens.
    # LayerNorm math in f32 regardless of input dtype.
    z = x_ref[...].astype(jnp.float32) + res_ref[...].astype(jnp.float32)

    mean = jnp.mean(z, axis=-1, keepdims=True)
    zc = z - mean
    var = jnp.mean(zc * zc, axis=-1, keepdims=True)
    zn = zc * lax.rsqrt(var + eps)

    out = zn * gamma_ref[...] + beta_ref[...]
    o_ref[...] = out.astype(o_ref.dtype)


def add_norm(x, res, gamma, beta, *, eps=1e-5, tm=256):
    """out = LayerNorm(x + res) over the last dim.

    x, res: (B, S, d_model) -> (B, S, d_model)
    gamma, beta: (d_model,) LayerNorm affine parameters.
    """
    B, S, d_model = x.shape
    N = B * S
    x2 = x.reshape(N, d_model)
    r2 = res.reshape(N, d_model)

    # 2-D affine params so they map onto (sublane, lane) tiles; f32 VPU math.
    g2 = gamma.reshape(1, d_model).astype(jnp.float32)
    b2 = beta.reshape(1, d_model).astype(jnp.float32)

    # Token tile: big (MXU/VPU-friendly, amortizes per-step overhead) but
    # never larger than N.  When tiling (tm < N) keep it a multiple of 8
    # so the sublane constraint is satisfied.
    tm = min(tm, N)
    if tm < N:
        tm = max(8, (tm // 8) * 8)
    grid = (pl.cdiv(N, tm),)

    out2 = pl.pallas_call(
        functools.partial(_add_norm_kernel, eps=eps),
        out_shape=jax.ShapeDtypeStruct((N, d_model), x.dtype),
        grid_spec=pltpu.PrefetchScalarGridSpec(
            num_scalar_prefetch=0,
            grid=grid,
            in_specs=[
                pl.BlockSpec((tm, d_model), lambda i: (i, 0)),   # x tile
                pl.BlockSpec((tm, d_model), lambda i: (i, 0)),   # res tile
                pl.BlockSpec((1, d_model), lambda i: (0, 0)),    # gamma
                pl.BlockSpec((1, d_model), lambda i: (0, 0)),    # beta
            ],
            out_specs=pl.BlockSpec((tm, d_model), lambda i: (i, 0)),
        ),
        compiler_params=pltpu.CompilerParams(
            dimension_semantics=("parallel",),
            vmem_limit_bytes=48 * 1024 * 1024,   # headroom on v7x's 64 MiB
        ),
    )(x2, r2, g2, b2)

    return out2.reshape(B, S, d_model)


def add_norm_ref(x, res, gamma, beta, eps=1e-5):
    """Pure-JAX reference (mirrors PyTorch AddNorm.forward)."""
    z = x + res
    mean = jnp.mean(z, axis=-1, keepdims=True)
    var = jnp.mean((z - mean) ** 2, axis=-1, keepdims=True)
    return (z - mean) / jnp.sqrt(var + eps) * gamma + beta


if __name__ == "__main__":
    # Small but lane-dense shapes: d_model is a multiple of 128.
    B, S, d_model = 2, 8, 128

    key = jax.random.PRNGKey(0)
    kx, kr, kg, kb = jax.random.split(key, 4)

    x = jax.random.normal(kx, (B, S, d_model), dtype=jnp.float32)
    res = jax.random.normal(kr, (B, S, d_model), dtype=jnp.float32)
    # LayerNorm parameters (learnable; perturbed from the 1/0 init so the
    # affine path is actually exercised).
    gamma = 1.0 + 0.1 * jax.random.normal(kg, (d_model,), dtype=jnp.float32)
    beta = 0.1 * jax.random.normal(kb, (d_model,), dtype=jnp.float32)

    out = add_norm(x, res, gamma, beta)
    out = jax.block_until_ready(out)

    ref = add_norm_ref(x, res, gamma, beta)
    assert out.shape == (B, S, d_model)
    assert jnp.allclose(out, ref, atol=1e-5, rtol=1e-5), (
        float(jnp.max(jnp.abs(out - ref))))

    print("KERNEL_OK")
</pallas_src>

<mosaic_0001>
module attributes {stable_mosaic.version = 11 : i64} {
  func.func @_add_norm_kernel(%arg0: i32, %arg1: memref<16x128xf32, #tpu.memory_space<vmem>>, %arg2: memref<16x128xf32, #tpu.memory_space<vmem>>, %arg3: memref<1x128xf32, #tpu.memory_space<vmem>>, %arg4: memref<1x128xf32, #tpu.memory_space<vmem>>, %arg5: memref<16x128xf32, #tpu.memory_space<vmem>>) attributes {dimension_semantics = [#tpu.dimension_semantics<parallel>], iteration_bounds = array<i64: 1>, scalar_prefetch = 0 : i64, scratch_operands = 0 : i64, tpu.core_type = #tpu.core_type<tc>, window_params = [{transform_indices = @transform_0, window_bounds = array<i64: 16, 128>}, {transform_indices = @transform_1, window_bounds = array<i64: 16, 128>}, {pipeline_mode = #tpu.pipeline_mode<synchronous>, transform_indices = @transform_2, window_bounds = array<i64: 1, 128>}, {pipeline_mode = #tpu.pipeline_mode<synchronous>, transform_indices = @transform_3, window_bounds = array<i64: 1, 128>}, {transform_indices = @transform_4, window_bounds = array<i64: 16, 128>}]} {
    %c0 = arith.constant 0 : index
    %c0_0 = arith.constant 0 : index
    %0 = vector.load %arg1[%c0, %c0_0] : memref<16x128xf32, #tpu.memory_space<vmem>>, vector<16x128xf32>
    %c0_1 = arith.constant 0 : index
    %c0_2 = arith.constant 0 : index
    %1 = vector.load %arg2[%c0_1, %c0_2] : memref<16x128xf32, #tpu.memory_space<vmem>>, vector<16x128xf32>
    %2 = arith.addf %0, %1 : vector<16x128xf32>
    %cst = arith.constant dense<0.000000e+00> : vector<16xf32>
    %3 = vector.multi_reduction <add>, %2, %cst [1] : vector<16x128xf32> to vector<16xf32>
    %4 = vector.shape_cast %3 : vector<16xf32> to vector<16x1xf32>
    %cst_3 = arith.constant 1.280000e+02 : f32
    %5 = vector.broadcast %cst_3 : f32 to vector<16x1xf32>
    %6 = arith.divf %4, %5 : vector<16x1xf32>
    %7 = vector.broadcast %6 : vector<16x1xf32> to vector<16x128xf32>
    %8 = arith.subf %2, %7 : vector<16x128xf32>
    %9 = arith.mulf %8, %8 : vector<16x128xf32>
    %cst_4 = arith.constant dense<0.000000e+00> : vector<16xf32>
    %10 = vector.multi_reduction <add>, %9, %cst_4 [1] : vector<16x128xf32> to vector<16xf32>
    %11 = vector.shape_cast %10 : vector<16xf32> to vector<16x1xf32>
    %cst_5 = arith.constant 1.280000e+02 : f32
    %12 = vector.broadcast %cst_5 : f32 to vector<16x1xf32>
    %13 = arith.divf %11, %12 : vector<16x1xf32>
    %cst_6 = arith.constant 9.99999974E-6 : f32
    %14 = vector.broadcast %cst_6 : f32 to vector<16x1xf32>
    %15 = arith.addf %13, %14 : vector<16x1xf32>
    %16 = math.rsqrt %15 : vector<16x1xf32>
    %17 = vector.broadcast %16 : vector<16x1xf32> to vector<16x128xf32>
    %18 = arith.mulf %8, %17 : vector<16x128xf32>
    %c0_7 = arith.constant 0 : index
    %c0_8 = arith.constant 0 : index
    %19 = vector.load %arg3[%c0_7, %c0_8] : memref<1x128xf32, #tpu.memory_space<vmem>>, vector<1x128xf32>
    %20 = vector.broadcast %19 : vector<1x128xf32> to vector<16x128xf32>
    %21 = arith.mulf %18, %20 : vector<16x128xf32>
    %c0_9 = arith.constant 0 : index
    %c0_10 = arith.constant 0 : index
    %22 = vector.load %arg4[%c0_9, %c0_10] : memref<1x128xf32, #tpu.memory_space<vmem>>, vector<1x128xf32>
    %23 = vector.broadcast %22 : vector<1x128xf32> to vector<16x128xf32>
    %24 = arith.addf %21, %23 : vector<16x128xf32>
    %c0_11 = arith.constant 0 : index
    %c0_12 = arith.constant 0 : index
    %25 = vector.load %arg5[%c0_11, %c0_12] : memref<16x128xf32, #tpu.memory_space<vmem>>, vector<16x128xf32>
    tpu.vector_store %arg5[%c0_11, %c0_12], %24 {strides = array<i32>} : memref<16x128xf32, #tpu.memory_space<vmem>>, vector<16x128xf32>,
    return
  }
  func.func @transform_0(%arg0: i32) -> (i32, i32) {
    %c0_i32 = arith.constant 0 : i32
    %c0_i32_0 = arith.constant 0 : i32
    return %arg0, %c0_i32 : i32, i32
  }
  func.func @transform_1(%arg0: i32) -> (i32, i32) {
    %c0_i32 = arith.constant 0 : i32
    %c0_i32_0 = arith.constant 0 : i32
    return %arg0, %c0_i32 : i32, i32
  }
  func.func @transform_2(%arg0: i32) -> (i32, i32) {
    %c0_i32 = arith.constant 0 : i32
    %c0_i32_0 = arith.constant 0 : i32
    %c0_i32_1 = arith.constant 0 : i32
    return %c0_i32, %c0_i32_0 : i32, i32
  }
  func.func @transform_3(%arg0: i32) -> (i32, i32) {
    %c0_i32 = arith.constant 0 : i32
    %c0_i32_0 = arith.constant 0 : i32
    %c0_i32_1 = arith.constant 0 : i32
    return %c0_i32, %c0_i32_0 : i32, i32
  }
  func.func @transform_4(%arg0: i32) -> (i32, i32) {
    %c0_i32 = arith.constant 0 : i32
    %c0_i32_0 = arith.constant 0 : i32
    return %arg0, %c0_i32 : i32, i32
  }
}

</mosaic_0001>

<llo_original>
// kernel: tpu_custom_call.1
$region0: #{tpu_custom_call.1}
  #allocation0 [shape = 'u32[]', space=smem, size = 0x4, offset = 0x4, fixed_abs, tag = 'smem constant byte address 0x4 - core index']
  #allocation1 [shape = 'u32[144,128]{1,0:T(1,128)}', space=vmem, size = 0x12000, scoped, tag = 'internal scratch']
  %s0 = inlined_call_operand.hbm [shape: f32[16,128], index: 0, kind: input, shape index: {}]
  %s1 = inlined_call_operand.hbm [shape: f32[16,128], index: 1, kind: input, shape index: {}]
  %s2 = inlined_call_operand.vmem [shape: f32[1,128], index: 2, kind: input, shape index: {}]
  %s3 = inlined_call_operand.vmem [shape: f32[1,128], index: 3, kind: input, shape index: {}]
  %s4 = inlined_call_operand.hbm [shape: f32[16,128], index: 4, kind: output, shape index: {}]
  %s5 = sld [smem:[#allocation0]]
  $region34: #{tpu_custom_call.1} parent=0
    _
  %s7 = ssub.s32 1, %s5
  %s8 = scalar_select 0, %s7, %s5
  $region1: #{tpu_custom_call.1} parent=0
    #allocation2 [shape = 'u8[8192]{0}', space=vmem, size = 0x2000, scoped, tag = 'input window, operand 0, single buffered']
    #allocation3 [shape = 's32[1]{0}', space=sflag, size = 0x4, scoped, tag = 'scoped memory for tpu_custom_call.1']
    #allocation4 [shape = 's32[1]{0}', space=sflag, size = 0x4, scoped, tag = 'scoped memory for tpu_custom_call.1']
    #allocation5 [shape = 'u8[8192]{0}', space=vmem, size = 0x2000, scoped, tag = 'input window, operand 1, single buffered']
    #allocation6 [shape = 's32[1]{0}', space=sflag, size = 0x4, scoped, tag = 'scoped memory for tpu_custom_call.1']
    #allocation7 [shape = 'u8[8192]{0}', space=vmem, size = 0x2000, scoped, tag = 'output window, operand 0, single buffered']
    %9 = vsyncpa [#allocation3], 0
    %10 = vsyncpa [#allocation6], 0
    %11 = vsyncpa [#allocation4], 0
    // Predicated region
    $region2: #{tpu_custom_call.1} parent=1 // pred_check
      _
    $region3: #{tpu_custom_call.1} parent=1 // pred_check_branch
      %13 = sbr.rel (0) target = $region5
    $region4: #{tpu_custom_call.1} parent=1 // pred_region
      %s15 = ssub.s32 256, 256
      %16 = vsyncadd [#allocation3], %s15
      %s17 = sshll.u32 [#allocation2], 4
      %s18 = int_to_ptr.vmem [resolvable:$true] %s17
      %23 = dma.hbm_to_vmem [thread:$0]  %s0, 256, %s18, [#allocation3], 128, 128, 8
    $region5: #{tpu_custom_call.1} parent=1 // pred_fallthru
      _
    // Predicated region
    $region6: #{tpu_custom_call.1} parent=1 // pred_check
      _
    $region7: #{tpu_custom_call.1} parent=1 // pred_check_branch
      %25 = sbr.rel (0) target = $region9
    $region8: #{tpu_custom_call.1} parent=1 // pred_region
      %s27 = ssub.s32 256, 256
      %28 = vsyncadd [#allocation6], %s27
      %s29 = sshll.u32 [#allocation5], 4
      %s30 = int_to_ptr.vmem [resolvable:$true] %s29
      %35 = dma.hbm_to_vmem [thread:$0]  %s1, 256, %s30, [#allocation6], 128, 128, 8
    $region9: #{tpu_custom_call.1} parent=1 // pred_fallthru
      _
    // Predicated region
    $region10: #{tpu_custom_call.1} parent=1 // pred_check
      _
    $region11: #{tpu_custom_call.1} parent=1 // pred_check_branch
      %37 = sbr.rel (0) target = $region13
    $region12: #{tpu_custom_call.1} parent=1 // pred_region
      _
    $region13: #{tpu_custom_call.1} parent=1 // pred_fallthru
      _
    // Predicated region
    $region14: #{tpu_custom_call.1} parent=1 // pred_check
      _
    $region15: #{tpu_custom_call.1} parent=1 // pred_check_branch
      %39 = sbr.rel (0) target = $region17
    $region16: #{tpu_custom_call.1} parent=1 // pred_region
      _
    $region17: #{tpu_custom_call.1} parent=1 // pred_fallthru
      _
    // Predicated region
    $region18: #{tpu_custom_call.1} parent=1 // pred_check
      _
    $region19: #{tpu_custom_call.1} parent=1 // pred_check_branch
      %41 = sbr.rel (0) target = $region21
    $region20: #{tpu_custom_call.1} parent=1 // pred_region
      %42 = dma.done [#allocation3], 256
    $region21: #{tpu_custom_call.1} parent=1 // pred_fallthru
      _
    // Predicated region
    $region22: #{tpu_custom_call.1} parent=1 // pred_check
      _
    $region23: #{tpu_custom_call.1} parent=1 // pred_check_branch
      %44 = sbr.rel (0) target = $region25
    $region24: #{tpu_custom_call.1} parent=1 // pred_region
      %45 = dma.done [#allocation6], 256
    $region25: #{tpu_custom_call.1} parent=1 // pred_fallthru
      _
    %v46 = vld [vmem:[#allocation2] sm:$0xff]
    %v47 = vld [vmem:[#allocation2 + $0x8] sm:$0xff]
    %v48 = vld [vmem:[#allocation5] sm:$0xff]
    %v49 = vld [vmem:[#allocation5 + $0x8] sm:$0xff]
    %v50 = vadd.f32 %v46, %v48
    %v51 = vadd.f32 %v47, %v49
    %52 = vadd.xlane.f32.xlu0 %v50
    %v53 = vpop.xlane.xlu0 %52
    %54 = vadd.xlane.f32.xlu0 %v51
    %v55 = vpop.xlane.xlu0 %54
    %v56 = vrcp.pop 128.0
    %v57 = vmul.f32 %v53, %v56
    %v58 = vmul.f32 %v55, %v56
    %v59 = vsub.f32 %v50, %v57
    %v60 = vsub.f32 %v51, %v58
    %v61 = vmul.f32 %v59, %v59
    %v62 = vmul.f32 %v60, %v60
    %63 = vadd.xlane.f32.xlu0 %v61
    %v64 = vpop.xlane.xlu0 %63
    %65 = vadd.xlane.f32.xlu0 %v62
    %v66 = vpop.xlane.xlu0 %65
    %v67 = vmul.f32 %v64, %v56
    %v68 = vmul.f32 %v66, %v56
    %v69 = vadd.f32 %v67, 1e-05
    %v70 = vadd.f32 %v68, 1e-05
    %v71 = vrsqrt.pop %v69
    %v72 = vrsqrt.pop %v70
    %v73 = vmul.f32 %v59, %v71
    %v74 = vmul.f32 %v60, %v72
    %v75 = vld [vmem:[%s2] sm:$0x1]
    %v77 = vlaneseq
    %v78 = vshrl.u32 %v77, 7
    %v79 = vsub.s32 0, %v78
    %v80 = vrot.slane %v75, %v79
    %v82 = vmul.f32 %v73, %v80
    %v83 = vmul.f32 %v74, %v80
    %v84 = vld [vmem:[%s3] sm:$0x1]
    %v86 = vlaneseq
    %v87 = vshrl.u32 %v86, 7
    %v88 = vsub.s32 0, %v87
    %v89 = vrot.slane %v84, %v88
    %v91 = vadd.f32 %v82, %v89
    %v92 = vadd.f32 %v83, %v89
    %93 = vst [vmem:[#allocation7] sm:$0xff] %v91
    %94 = vst [vmem:[#allocation7 + $0x8] sm:$0xff] %v92
    // Predicated region
    $region26: #{tpu_custom_call.1} parent=1 // pred_check
      _
    $region27: #{tpu_custom_call.1} parent=1 // pred_check_branch
      %96 = sbr.rel (0) target = $region29
    $region28: #{tpu_custom_call.1} parent=1 // pred_region
      %s98 = ssub.s32 256, 256
      %99 = vsyncadd [#allocation4], %s98
      %s100 = sshll.u32 [#allocation7], 4
      %s101 = int_to_ptr.vmem [resolvable:$true] %s100
      %106 = dma.vmem_to_hbm [thread:$0]  %s101, 256, %s4, [#allocation4], 128, 128, 8
    $region29: #{tpu_custom_call.1} parent=1 // pred_fallthru
      _
    // Predicated region
    $region30: #{tpu_custom_call.1} parent=1 // pred_check
      _
    $region31: #{tpu_custom_call.1} parent=1 // pred_check_branch
      %108 = sbr.rel (0) target = $region33
    $region32: #{tpu_custom_call.1} parent=1 // pred_region
      %109 = dma.done [#allocation4], 256
    $region33: #{tpu_custom_call.1} parent=1 // pred_fallthru
      _
    %110 = vsyncpa [#allocation3], 1
    %111 = vsyncpa [#allocation6], 1
    %112 = vsyncpa [#allocation4], 1

</llo_original>
